<compile_context>
chip_gen: v6e
topology: v6e:2x2x1
jax: 0.10.0
libtpu: 0.0.40
codegen_flags: <defaults>
</compile_context>

<pallas_src>
import math

import jax
import jax.numpy as jnp
from jax.experimental import pallas as pl
from jax.experimental.pallas import tpu as pltpu


_MIB = 1024 * 1024


def _gelu_tanh(x):
    # tanh-approximate GELU (EUP-friendly).
    # TODO(synk): torch.nn.GELU() defaults to the exact erf form; deviation is <~1e-3/layer.
    c = math.sqrt(2.0 / math.pi)
    return 0.5 * x * (1.0 + jnp.tanh(c * (x + 0.044715 * x * x * x)))


def _padded_tile_bytes(shape, dtype):
    """Bytes of one VMEM buffer of `shape`, last two dims padded to (8, 128)."""
    shape = tuple(int(d) for d in shape)
    if len(shape) == 1:
        shape = (1,) + shape
    lead = 1
    for d in shape[:-2]:
        lead *= d
    sub = -(-shape[-2] // 8) * 8
    lane = -(-shape[-1] // 128) * 128
    return lead * sub * lane * jnp.dtype(dtype).itemsize


def _vmem_budget_and_cap():
    """Generation-aware (tiling budget, vmem_limit cap) in bytes."""
    vmem_bytes = 64 * _MIB              # conservative default = v7x per-TensorCore VMEM
    try:
        info = pltpu.get_tpu_info()
        vmem_bytes = int(getattr(info, "vmem_capacity_bytes", vmem_bytes))
    except Exception:                   # off-TPU tracing / API drift: stay conservative
        pass
    cap = max(32 * _MIB, min(100 * _MIB, vmem_bytes - 16 * _MIB))   # 48 MiB on v7x, 100 on v5e/v6e
    budget = max(24 * _MIB, cap - 8 * _MIB)                          # 40 MiB on v7x, 92 on v5e/v6e
    return budget, cap


# ----------------------------- kernels -------------------------------------------------------


def _linear_stack_kernel(w_ref, b_ref, x_ref, o_ref, carry_ref):
    # One layer per depth step:  carry <- (mask(W)+I) @ carry + b   (residual folded into W).
    # w_ref: (T, T) pre-masked weight;  b_ref: (T, 1) f32;  x/o: (T, tn);  carry: (T, tn) f32.
    d = pl.program_id(1)

    @pl.when(d == 0)
    def _():
        carry_ref[...] = x_ref[...].astype(jnp.float32)

    w = w_ref[...]
    x = carry_ref[...]
    carry_ref[...] = (
        jnp.dot(w, x.astype(w.dtype), preferred_element_type=jnp.float32) + b_ref[...]
    )

    @pl.when(d == pl.num_programs(1) - 1)
    def _():
        o_ref[...] = carry_ref[...].astype(o_ref.dtype)


def _expand_stack_kernel(w1_ref, b1_ref, w2_ref, b2_ref, x_ref, o_ref, carry_ref):
    # One layer per depth step:  carry <- W2 @ GELU(W1 @ carry + b1) + b2 + carry.
    d = pl.program_id(1)

    @pl.when(d == 0)
    def _():
        carry_ref[...] = x_ref[...].astype(jnp.float32)

    w1 = w1_ref[...]
    w2 = w2_ref[...]
    x = carry_ref[...]
    h = jnp.dot(w1, x.astype(w1.dtype), preferred_element_type=jnp.float32) + b1_ref[...]
    g = _gelu_tanh(h)                                       # f32 VPU/EUP math (v5e-safe)
    y = jnp.dot(w2, g.astype(w2.dtype), preferred_element_type=jnp.float32) + b2_ref[...]
    carry_ref[...] = y + x

    @pl.when(d == pl.num_programs(1) - 1)
    def _():
        o_ref[...] = carry_ref[...].astype(o_ref.dtype)


# ----------------------------- wrapper --------------------------------------------------------


def mixer_block_stack(x, weight, bias, weight2=None, bias2=None, *,
                      clm_mask=True, expand_conv=False,
                      compute_dtype=None, out_dtype=None):
    """Fused stack of MixerBlocks (depth = leading axis of the stacked weights).

    x: (B, T, F) or (B, P, T, F).  A 4-D input is flattened to ((B*P), T, F) exactly like
       the PyTorch module (which does not undo the flatten).
    weight/bias:   stacked Conv1d(T, T, 1) params, shapes (depth, T, T, 1) / (depth, T);
                   a single un-stacked layer ((T, T, 1) / (T,)) is also accepted.
    weight2/bias2: second conv of ConvForward, same layout (required iff expand_conv=True).
    """
    if weight.ndim == 3:                                    # single layer -> depth-1 stack
        weight, bias = weight[None], bias[None]
        if weight2 is not None:
            weight2, bias2 = weight2[None], bias2[None]
    depth = weight.shape[0]

    if x.ndim > 3:
        x = x.reshape((-1,) + x.shape[-2:])                 # 'b p t f -> (b p) t f'
    B, T, F = x.shape
    out_dtype = jnp.dtype(out_dtype) if out_dtype is not None else x.dtype
    cdt = jnp.dtype(compute_dtype) if compute_dtype is not None else x.dtype

    def prep_w(w, add_identity):
        w2d = w[..., 0]                                     # 'l f d p -> l f (d p)', p == 1
        if clm_mask:
            w2d = jnp.tril(w2d)                             # causal mask hoisted out of kernel
        if add_identity:
            w2d = w2d + jnp.eye(w2d.shape[-1], dtype=w2d.dtype)
        return w2d.astype(cdt)

    if expand_conv:
        assert weight2 is not None and bias2 is not None
        w1 = prep_w(weight, add_identity=False)             # (depth, inner, T)
        w2 = prep_w(weight2, add_identity=False)            # (depth, T, inner)
        b1 = bias.astype(jnp.float32).reshape(depth, -1, 1)
        b2 = bias2.astype(jnp.float32).reshape(depth, -1, 1)
        operands = (w1, b1, w2, b2)
        kernel = _expand_stack_kernel
    else:
        w1 = prep_w(weight, add_identity=True)              # residual folded: mask(W) + I
        b1 = bias.astype(jnp.float32).reshape(depth, -1, 1)
        operands = (w1, b1)
        kernel = _linear_stack_kernel

    # Token-major, lane-dense slab: (T, B*F), zero-padded to a multiple of 128 lanes.
    xt = jnp.transpose(x, (1, 0, 2)).reshape(T, B * F)
    N = B * F
    Np = -(-N // 128) * 128
    if Np != N:
        xt = jnp.pad(xt, ((0, 0), (0, Np - N)))

    # ---- lane-tile selection against a generation-aware VMEM budget --------------------------
    budget, cap = _vmem_budget_and_cap()

    def footprint(tn):
        fp = 0
        for op in operands:                                 # per-layer blocks, double buffered
            fp += 2 * _padded_tile_bytes(op.shape[1:], op.dtype)
        fp += 2 * _padded_tile_bytes((T, tn), xt.dtype)     # streamed input
        fp += 2 * _padded_tile_bytes((T, tn), out_dtype)    # streamed output
        fp += _padded_tile_bytes((T, tn), jnp.float32)      # resident f32 carry
        fp += (2 if expand_conv else 1) * _padded_tile_bytes((T, tn), jnp.float32)  # live h/g
        return fp

    n128 = Np // 128
    cands = [128 * k for k in range(1, n128 + 1) if n128 % k == 0]
    fitting = [tn for tn in cands if footprint(tn) <= budget]
    if fitting:
        multi = [tn for tn in fitting if Np // tn >= 2]     # keep >=2 grid steps when possible
        tn = max(multi) if multi else max(fitting)
    else:
        tn = 128
        # TODO(synk): for very large T the (T, T) weight blocks alone exceed VMEM; tile the
        #             token contraction axis (and skip fully-masked causal K-blocks) there.

    vmem_limit = int(min(cap, max(32 * _MIB, footprint(tn) + 8 * _MIB)))

    w_specs = [pl.BlockSpec((None,) + op.shape[1:], lambda n, d: (d, 0, 0))
               for op in operands]
    x_spec = pl.BlockSpec((T, tn), lambda n, d: (0, n))     # constant along depth -> resident
    o_spec = pl.BlockSpec((T, tn), lambda n, d: (0, n))     # written back only when n advances

    yt = pl.pallas_call(
        kernel,
        out_shape=jax.ShapeDtypeStruct((T, Np), out_dtype),
        grid_spec=pltpu.PrefetchScalarGridSpec(
            num_scalar_prefetch=0,
            grid=(Np // tn, depth),                         # depth last (fastest, "arbitrary")
            in_specs=w_specs + [x_spec],
            out_specs=o_spec,
            scratch_shapes=[pltpu.VMEM((T, tn), jnp.float32)],
        ),
        compiler_params=pltpu.CompilerParams(
            dimension_semantics=("parallel", "arbitrary"),
            vmem_limit_bytes=vmem_limit,
        ),
    )(*operands, xt)

    if Np != N:
        yt = yt[:, :N]
    return jnp.transpose(yt.reshape(T, B, F), (1, 0, 2))    # back to (B, T, F)


# A single MixerBlock is just a depth-1 stack.
mixer_block = mixer_block_stack


# ----------------------------- LanguageMixer forward ------------------------------------------


def init_language_mixer_params(key, n_vocab, dim, length, depth):
    ks = jax.random.split(key, 2 + 4 * depth)
    params = {
        "wte": jax.random.normal(ks[0], (n_vocab, dim), jnp.float32) * 0.02,
        "lm_head": jax.random.normal(ks[1], (n_vocab, dim), jnp.float32) * 0.02,
        "blocks": [],
    }
    for d in range(depth):
        k0, k1, k2, k3 = ks[2 + 4 * d: 6 + 4 * d]
        params["blocks"].append({
            "w1": jax.random.normal(k0, (length, length, 1), jnp.float32) * 0.1,
            "b1": jax.random.normal(k1, (length,), jnp.float32) * 0.1,
            "w2": jax.random.normal(k2, (length, length, 1), jnp.float32) * 0.1,
            "b2": jax.random.normal(k3, (length,), jnp.float32) * 0.1,
        })
    return params


def language_mixer_forward(input_ids, params, *, compute_dtype=jnp.bfloat16,
                           stream_dtype=None):
    """LanguageMixer.forward up to the logits.

    All `depth` MixerBlocks (expand_conv=True, clm_mask=True) run as ONE fused Pallas kernel;
    the embedding gather and the lm_head matmul are plain dense ops left to XLA.
    Activations stream through the block stack in `stream_dtype` (defaults to `compute_dtype`,
    bf16 by default) with f32 accumulation/carry inside the kernel.
    TODO(synk): the cross-entropy loss (label shift + CE over the vocab) is not
    reimplemented as a Pallas kernel.
    """
    stream = jnp.dtype(stream_dtype if stream_dtype is not None else compute_dtype)
    x = params["wte"][input_ids]                            # (B, P, T, D) or (B, T, D)
    w1 = jnp.stack([blk["w1"] for blk in params["blocks"]])
    b1 = jnp.stack([blk["b1"] for blk in params["blocks"]])
    w2 = jnp.stack([blk["w2"] for blk in params["blocks"]])
    b2 = jnp.stack([blk["b2"] for blk in params["blocks"]])
    x = mixer_block_stack(x.astype(stream), w1, b1, w2, b2,
                          clm_mask=True, expand_conv=True,
                          compute_dtype=compute_dtype, out_dtype=stream)
    return x.astype(jnp.float32) @ params["lm_head"].T      # (B*P, T, n_vocab)


# ----------------------------- pure-JAX references --------------------------------------------


def _mixer_block_ref(x, weight, bias, weight2=None, bias2=None, *,
                     clm_mask=True, expand_conv=False):
    if x.ndim > 3:
        x = x.reshape((-1,) + x.shape[-2:])
    mask = (lambda w: jnp.tril(w)) if clm_mask else (lambda w: w)
    if not expand_conv:
        w = mask(weight[..., 0])
        return jnp.einsum("oi,bif->bof", w, x) + bias[None, :, None] + x
    w1 = mask(weight[..., 0])
    w2 = mask(weight2[..., 0])
    h = jnp.einsum("oi,bif->bof", w1, x) + bias[None, :, None]
    g = _gelu_tanh(h)
    return jnp.einsum("oi,bif->bof", w2, g) + bias2[None, :, None] + x


def _language_mixer_ref(input_ids, params):
    x = params["wte"][input_ids]
    for blk in params["blocks"]:
        x = _mixer_block_ref(x, blk["w1"], blk["b1"], blk["w2"], blk["b2"],
                             clm_mask=True, expand_conv=True)
    return x @ params["lm_head"].T


# ----------------------------- demo ------------------------------------------------------------


if __name__ == "__main__":
    key = jax.random.PRNGKey(0)
    # Small shapes consistent with the module: tokenized_length T, model dim F.
    B, P, T, F = 2, 2, 64, 32
    n_vocab, depth = 512, 2
    ks = jax.random.split(key, 8)

    x4 = jax.random.normal(ks[0], (B, P, T, F), dtype=jnp.float32)
    w = jax.random.normal(ks[1], (T, T, 1), dtype=jnp.float32) * 0.1
    b = jax.random.normal(ks[2], (T,), dtype=jnp.float32) * 0.1
    w2 = jax.random.normal(ks[3], (T, T, 1), dtype=jnp.float32) * 0.1
    b2 = jax.random.normal(ks[4], (T,), dtype=jnp.float32) * 0.1

    # 1) non-expanded causal block (residual folded into the pre-masked weight), 4-D input.
    out = jax.block_until_ready(mixer_block(x4, w, b, clm_mask=True, expand_conv=False))
    ref = _mixer_block_ref(x4, w, b, clm_mask=True, expand_conv=False)
    assert out.shape == (B * P, T, F)
    assert jnp.allclose(out, ref, atol=5e-2, rtol=1e-2), "linear masked block mismatch"

    # 2) same block with bf16 MXU operands + f32 accumulation.
    out_bf16 = jax.block_until_ready(
        mixer_block(x4, w, b, clm_mask=True, expand_conv=False, compute_dtype=jnp.bfloat16))
    assert jnp.allclose(out_bf16, ref, atol=1.5e-1, rtol=5e-2), "bf16 block mismatch"

    # 3) unmasked path (clm_mask=False).
    out_nm = jax.block_until_ready(mixer_block(x4, w, b, clm_mask=False, expand_conv=False))
    ref_nm = _mixer_block_ref(x4, w, b, clm_mask=False, expand_conv=False)
    assert jnp.allclose(out_nm, ref_nm, atol=5e-2, rtol=1e-2), "unmasked block mismatch"

    # 4) expanded conv block (conv -> GELU -> conv -> +residual) -- what LanguageMixer uses.
    out_e = jax.block_until_ready(
        mixer_block(x4, w, b, w2, b2, clm_mask=True, expand_conv=True))
    ref_e = _mixer_block_ref(x4, w, b, w2, b2, clm_mask=True, expand_conv=True)
    assert jnp.allclose(out_e, ref_e, atol=5e-2, rtol=1e-2), "expand-conv block mismatch"

    # 5) fused depth-stack LanguageMixer forward in f32 vs the per-block reference.
    params = init_language_mixer_params(ks[5], n_vocab, F, T, depth)
    input_ids = jax.random.randint(ks[6], (B, P, T), 0, n_vocab)
    logits_f32 = jax.block_until_ready(
        language_mixer_forward(input_ids, params, compute_dtype=jnp.float32))
    ref_logits = _language_mixer_ref(input_ids, params)
    assert logits_f32.shape == (B * P, T, n_vocab)
    assert jnp.allclose(logits_f32, ref_logits, atol=2e-3, rtol=1e-2), "fused f32 mismatch"

    # 6) default path: bf16 activation streaming + bf16 MXU operands through the fused stack.
    logits_bf16 = jax.block_until_ready(language_mixer_forward(input_ids, params))
    assert logits_bf16.shape == (B * P, T, n_vocab)
    assert jnp.allclose(logits_bf16, ref_logits, atol=3e-2, rtol=1e-1), "fused bf16 mismatch"

    print("KERNEL_OK")
</pallas_src>

<mosaic_0001>
module attributes {stable_mosaic.version = 11 : i64} {
  func.func @_linear_stack_kernel(%arg0: i32, %arg1: i32, %arg2: memref<1x64x64xf32, #tpu.memory_space<vmem>>, %arg3: memref<1x64x1xf32, #tpu.memory_space<vmem>>, %arg4: memref<64x128xf32, #tpu.memory_space<vmem>>, %arg5: memref<64x128xf32, #tpu.memory_space<vmem>>, %arg6: memref<64x128xf32, #tpu.memory_space<vmem>>) attributes {dimension_semantics = [#tpu.dimension_semantics<parallel>, #tpu.dimension_semantics<arbitrary>], iteration_bounds = array<i64: 1, 1>, scalar_prefetch = 0 : i64, scratch_operands = 1 : i64, tpu.core_type = #tpu.core_type<tc>, window_params = [{transform_indices = @transform_0, window_bounds = array<i64: 1, 64, 64>}, {transform_indices = @transform_1, window_bounds = array<i64: 1, 64, 1>}, {transform_indices = @transform_2, window_bounds = array<i64: 64, 128>}, {transform_indices = @transform_3, window_bounds = array<i64: 64, 128>}]} {
    %c0_i32 = arith.constant 0 : i32
    %0 = arith.cmpi eq, %arg1, %c0_i32 : i32
    %1 = arith.extui %0 : i1 to i32
    %c0_i32_0 = arith.constant 0 : i32
    %2 = arith.cmpi ne, %1, %c0_i32_0 : i32
    scf.if %2 {
      %c0_12 = arith.constant 0 : index
      %c0_13 = arith.constant 0 : index
      %15 = vector.load %arg4[%c0_12, %c0_13] : memref<64x128xf32, #tpu.memory_space<vmem>>, vector<64x128xf32>
      %c0_14 = arith.constant 0 : index
      %c0_15 = arith.constant 0 : index
      %16 = vector.load %arg6[%c0_14, %c0_15] : memref<64x128xf32, #tpu.memory_space<vmem>>, vector<64x128xf32>
      tpu.vector_store %arg6[%c0_14, %c0_15], %15 {strides = array<i32>} : memref<64x128xf32, #tpu.memory_space<vmem>>, vector<64x128xf32>,
    } else {
    }
    %c0 = arith.constant 0 : index
    %c0_1 = arith.constant 0 : index
    %c0_2 = arith.constant 0 : index
    %3 = vector.load %arg2[%c0, %c0_1, %c0_2] : memref<1x64x64xf32, #tpu.memory_space<vmem>>, vector<1x64x64xf32>
    %4 = vector.shape_cast %3 : vector<1x64x64xf32> to vector<64x64xf32>
    %c0_3 = arith.constant 0 : index
    %c0_4 = arith.constant 0 : index
    %5 = vector.load %arg6[%c0_3, %c0_4] : memref<64x128xf32, #tpu.memory_space<vmem>>, vector<64x128xf32>
    %cst = arith.constant dense<0.000000e+00> : vector<64x128xf32>
    %6 = tpu.matmul %4, %5, %cst {dimension_numbers = #tpu.dot_dimension_numbers<[1], [0], [0], [1], [0, 0, 1, 1], [], []>} : vector<64x64xf32>, vector<64x128xf32>, vector<64x128xf32> -> vector<64x128xf32>
    %c0_5 = arith.constant 0 : index
    %c0_6 = arith.constant 0 : index
    %c0_7 = arith.constant 0 : index
    %7 = vector.load %arg3[%c0_5, %c0_6, %c0_7] : memref<1x64x1xf32, #tpu.memory_space<vmem>>, vector<1x64x1xf32>
    %8 = vector.shape_cast %7 : vector<1x64x1xf32> to vector<64x1xf32>
    %9 = vector.broadcast %8 : vector<64x1xf32> to vector<64x128xf32>
    %10 = arith.addf %6, %9 : vector<64x128xf32>
    %c0_8 = arith.constant 0 : index
    %c0_9 = arith.constant 0 : index
    %11 = vector.load %arg6[%c0_8, %c0_9] : memref<64x128xf32, #tpu.memory_space<vmem>>, vector<64x128xf32>
    tpu.vector_store %arg6[%c0_8, %c0_9], %10 {strides = array<i32>} : memref<64x128xf32, #tpu.memory_space<vmem>>, vector<64x128xf32>,
    %c0_i32_10 = arith.constant 0 : i32
    %12 = arith.cmpi eq, %arg1, %c0_i32_10 : i32
    %13 = arith.extui %12 : i1 to i32
    %c0_i32_11 = arith.constant 0 : i32
    %14 = arith.cmpi ne, %13, %c0_i32_11 : i32
    scf.if %14 {
      %c0_12 = arith.constant 0 : index
      %c0_13 = arith.constant 0 : index
      %15 = vector.load %arg6[%c0_12, %c0_13] : memref<64x128xf32, #tpu.memory_space<vmem>>, vector<64x128xf32>
      %c0_14 = arith.constant 0 : index
      %c0_15 = arith.constant 0 : index
      %16 = vector.load %arg5[%c0_14, %c0_15] : memref<64x128xf32, #tpu.memory_space<vmem>>, vector<64x128xf32>
      tpu.vector_store %arg5[%c0_14, %c0_15], %15 {strides = array<i32>} : memref<64x128xf32, #tpu.memory_space<vmem>>, vector<64x128xf32>,
    } else {
    }
    return
  }
  func.func @transform_0(%arg0: i32, %arg1: i32) -> (i32, i32, i32) {
    %c0_i32 = arith.constant 0 : i32
    %c0_i32_0 = arith.constant 0 : i32
    %c0_i32_1 = arith.constant 0 : i32
    return %arg1, %c0_i32, %c0_i32_0 : i32, i32, i32
  }
  func.func @transform_1(%arg0: i32, %arg1: i32) -> (i32, i32, i32) {
    %c0_i32 = arith.constant 0 : i32
    %c0_i32_0 = arith.constant 0 : i32
    %c0_i32_1 = arith.constant 0 : i32
    return %arg1, %c0_i32, %c0_i32_0 : i32, i32, i32
  }
  func.func @transform_2(%arg0: i32, %arg1: i32) -> (i32, i32) {
    %c0_i32 = arith.constant 0 : i32
    %c0_i32_0 = arith.constant 0 : i32
    return %c0_i32, %arg0 : i32, i32
  }
  func.func @transform_3(%arg0: i32, %arg1: i32) -> (i32, i32) {
    %c0_i32 = arith.constant 0 : i32
    %c0_i32_0 = arith.constant 0 : i32
    return %c0_i32, %arg0 : i32, i32
  }
}

</mosaic_0001>

<llo_original>
// kernel: tpu_custom_call.1
$region0: #{tpu_custom_call.1}
  #allocation0 [shape = 'u32[]', space=smem, size = 0x4, offset = 0x4, fixed_abs, tag = 'smem constant byte address 0x4 - core index']
  #allocation1 [shape = 'u32[144,128]{1,0:T(1,128)}', space=vmem, size = 0x12000, scoped, tag = 'internal scratch']
  #allocation2 [shape = 'f32[64,128]{1,0:T(8,128)}', space=vmem, size = 0x8000, scoped, tag = 'scratch operand']
  %s0 = inlined_call_operand.vmem [shape: f32[1,64,64], index: 0, kind: input, shape index: {}]
  %s1 = inlined_call_operand.vmem [shape: f32[1,64,1], index: 1, kind: input, shape index: {}]
  %s2 = inlined_call_operand.hbm [shape: f32[64,128], index: 2, kind: input, shape index: {}]
  %s3 = inlined_call_operand.hbm [shape: f32[64,128], index: 3, kind: output, shape index: {}]
  %s4 = sld [smem:[#allocation0]]
  $region34: #{tpu_custom_call.1} parent=0
    _
  %s6 = ssub.s32 1, %s4
  %s7 = scalar_select 0, %s6, %s4
  $region1: #{tpu_custom_call.1} parent=0
    #allocation3 [shape = 'u8[32768]{0}', space=vmem, size = 0x8000, scoped, tag = 'input window, operand 2, single buffered']
    #allocation4 [shape = 's32[1]{0}', space=sflag, size = 0x4, scoped, tag = 'scoped memory for tpu_custom_call.1']
    #allocation5 [shape = 's32[1]{0}', space=sflag, size = 0x4, scoped, tag = 'scoped memory for tpu_custom_call.1']
    #allocation6 [shape = 'u8[32768]{0}', space=vmem, size = 0x8000, scoped, tag = 'output window, operand 0, single buffered']
    %8 = vsyncpa [#allocation4], 0
    %9 = vsyncpa [#allocation5], 0
    // Predicated region
    $region2: #{tpu_custom_call.1} parent=1 // pred_check
      _
    $region3: #{tpu_custom_call.1} parent=1 // pred_check_branch
      %11 = sbr.rel (0) target = $region5
    $region4: #{tpu_custom_call.1} parent=1 // pred_region
      _
    $region5: #{tpu_custom_call.1} parent=1 // pred_fallthru
      _
    // Predicated region
    $region6: #{tpu_custom_call.1} parent=1 // pred_check
      _
    $region7: #{tpu_custom_call.1} parent=1 // pred_check_branch
      %13 = sbr.rel (0) target = $region9
    $region8: #{tpu_custom_call.1} parent=1 // pred_region
      _
    $region9: #{tpu_custom_call.1} parent=1 // pred_fallthru
      _
    // Predicated region
    $region10: #{tpu_custom_call.1} parent=1 // pred_check
      _
    $region11: #{tpu_custom_call.1} parent=1 // pred_check_branch
      %15 = sbr.rel (0) target = $region13
    $region12: #{tpu_custom_call.1} parent=1 // pred_region
      %s17 = ssub.s32 1024, 1024
      %18 = vsyncadd [#allocation4], %s17
      %s19 = sshll.u32 [#allocation3], 4
      %s20 = int_to_ptr.vmem [resolvable:$true] %s19
      %25 = dma.hbm_to_vmem [thread:$0]  %s2, 1024, %s20, [#allocation4], 128, 128, 8
    $region13: #{tpu_custom_call.1} parent=1 // pred_fallthru
      _
    // Predicated region
    $region14: #{tpu_custom_call.1} parent=1 // pred_check
      _
    $region15: #{tpu_custom_call.1} parent=1 // pred_check_branch
      %27 = sbr.rel (0) target = $region17
    $region16: #{tpu_custom_call.1} parent=1 // pred_region
      %28 = dma.done [#allocation4], 1024
    $region17: #{tpu_custom_call.1} parent=1 // pred_fallthru
      _
    %p29 = scmp.eq.s32.totalorder 0, 0
    // Predicated region
    $region18: #{tpu_custom_call.1} parent=1 // pred_check
      %p30 = pneg %p29
    $region19: #{tpu_custom_call.1} parent=1 // pred_check_branch
      %32 = sbr.rel (%p30) target = $region21
    $region20: #{tpu_custom_call.1} parent=1 // pred_region
      %v33 = vld [vmem:[#allocation3] sm:$0xff]
      %v34 = vld [vmem:[#allocation3 + $0x8] sm:$0xff]
      %v35 = vld [vmem:[#allocation3 + $0x10] sm:$0xff]
      %v36 = vld [vmem:[#allocation3 + $0x18] sm:$0xff]
      %v37 = vld [vmem:[#allocation3 + $0x20] sm:$0xff]
      %v38 = vld [vmem:[#allocation3 + $0x28] sm:$0xff]
      %v39 = vld [vmem:[#allocation3 + $0x30] sm:$0xff]
      %v40 = vld [vmem:[#allocation3 + $0x38] sm:$0xff]
      %41 = vst [vmem:[#allocation2] sm:$0xff] %v33
      %42 = vst [vmem:[#allocation2 + $0x8] sm:$0xff] %v34
      %43 = vst [vmem:[#allocation2 + $0x10] sm:$0xff] %v35
      %44 = vst [vmem:[#allocation2 + $0x18] sm:$0xff] %v36
      %45 = vst [vmem:[#allocation2 + $0x20] sm:$0xff] %v37
      %46 = vst [vmem:[#allocation2 + $0x28] sm:$0xff] %v38
      %47 = vst [vmem:[#allocation2 + $0x30] sm:$0xff] %v39
      %48 = vst [vmem:[#allocation2 + $0x38] sm:$0xff] %v40
    $region21: #{tpu_custom_call.1} parent=1 // pred_fallthru
      _
    %v49 = vld [vmem:[%s0] sm:$0xff]
    %v50 = vld [vmem:[%s0 + $0x8] sm:$0xff]
    %v51 = vld [vmem:[%s0 + $0x10] sm:$0xff]
    %v52 = vld [vmem:[%s0 + $0x18] sm:$0xff]
    %v53 = vld [vmem:[%s0 + $0x20] sm:$0xff]
    %v54 = vld [vmem:[%s0 + $0x28] sm:$0xff]
    %v55 = vld [vmem:[%s0 + $0x30] sm:$0xff]
    %v56 = vld [vmem:[%s0 + $0x38] sm:$0xff]
    %v57 = vld [vmem:[#allocation2] sm:$0xff]
    %v58 = vld [vmem:[#allocation2 + $0x8] sm:$0xff]
    %v59 = vld [vmem:[#allocation2 + $0x10] sm:$0xff]
    %v60 = vld [vmem:[#allocation2 + $0x18] sm:$0xff]
    %v61 = vld [vmem:[#allocation2 + $0x20] sm:$0xff]
    %v62 = vld [vmem:[#allocation2 + $0x28] sm:$0xff]
    %v63 = vld [vmem:[#allocation2 + $0x30] sm:$0xff]
    %v64 = vld [vmem:[#allocation2 + $0x38] sm:$0xff]
    %v65 = vld [vmem:[%s1] sm:$0xff]
    %v66 = vld [vmem:[%s1 + $0x8] sm:$0xff]
    %v67 = vld [vmem:[%s1 + $0x10] sm:$0xff]
    %v68 = vld [vmem:[%s1 + $0x18] sm:$0xff]
    %v69 = vld [vmem:[%s1 + $0x20] sm:$0xff]
    %v70 = vld [vmem:[%s1 + $0x28] sm:$0xff]
    %v71 = vld [vmem:[%s1 + $0x30] sm:$0xff]
    %v72 = vld [vmem:[%s1 + $0x38] sm:$0xff]
    %74 = vset.pattern.permute.xlu0 0
    %75 = vperm.xlu0 %74, %v65
    %v76 = vpop.permute.xlu0 %75
    %79 = vset.pattern.permute.xlu0 0
    %80 = vperm.xlu0 %79, %v66
    %v81 = vpop.permute.xlu0 %80
    %84 = vset.pattern.permute.xlu0 0
    %85 = vperm.xlu0 %84, %v67
    %v86 = vpop.permute.xlu0 %85
    %89 = vset.pattern.permute.xlu0 0
    %90 = vperm.xlu0 %89, %v68
    %v91 = vpop.permute.xlu0 %90
    %94 = vset.pattern.permute.xlu0 0
    %95 = vperm.xlu0 %94, %v69
    %v96 = vpop.permute.xlu0 %95
    %99 = vset.pattern.permute.xlu0 0
    %100 = vperm.xlu0 %99, %v70
    %v101 = vpop.permute.xlu0 %100
    %104 = vset.pattern.permute.xlu0 0
    %105 = vperm.xlu0 %104, %v71
    %v106 = vpop.permute.xlu0 %105
    %109 = vset.pattern.permute.xlu0 0
    %110 = vperm.xlu0 %109, %v72
    %v111 = vpop.permute.xlu0 %110
    %vm113 = vcmask 523264
    %v115 = vsel %vm113, %v49, 0
    %v118 = vsel %vm113, %v50, 0
    %v121 = vsel %vm113, %v51, 0
    %v124 = vsel %vm113, %v52, 0
    %v127 = vsel %vm113, %v53, 0
    %v130 = vsel %vm113, %v54, 0
    %v133 = vsel %vm113, %v55, 0
    %v136 = vsel %vm113, %v56, 0
    %138 = vmatprep.subr.mxu0 0.0
    %139 = vmatpush1.msra.mxu0 0.0
    %140 = vmatprep.subr.mxu0 0.0
    %141 = vmatpush1.msra.mxu0 0.0
    %142 = vmatprep.subr.mxu0 0.0
    %143 = vmatpush1.msra.mxu0 0.0
    %144 = vmatprep.subr.mxu0 0.0
    %145 = vmatpush1.msra.mxu0 0.0
    %146 = vmatprep.subr.mxu0 0.0
    %147 = vmatpush1.msra.mxu0 0.0
    %148 = vmatprep.subr.mxu0 0.0
    %149 = vmatpush1.msra.mxu0 0.0
    %150 = vmatprep.subr.mxu0 0.0
    %151 = vmatpush1.msra.mxu0 0.0
    %152 = vmatprep.subr.mxu0 0.0
    %153 = vmatpush1.msra.mxu0 0.0
    %154 = vmatprep.subr.mxu0 0.0
    %155 = vmatpush1.msra.mxu0 %v64
    %156 = vmatprep.subr.mxu0 0.0
    %157 = vmatpush1.msra.mxu0 %v63
    %158 = vmatprep.subr.mxu0 0.0
    %159 = vmatpush1.msra.mxu0 %v62
    %160 = vmatprep.subr.mxu0 0.0
    %161 = vmatpush1.msra.mxu0 %v61
    %162 = vmatprep.subr.mxu0 0.0
    %163 = vmatpush1.msra.mxu0 %v60
    %164 = vmatprep.subr.mxu0 0.0
    %165 = vmatpush1.msra.mxu0 %v59
    %166 = vmatprep.subr.mxu0 0.0
    %167 = vmatpush1.msra.mxu0 %v58
    %168 = vmatprep.subr.mxu0 0.0
    %169 = vmatpush1.msra.mxu0 %v57
    %170 = vmatprep.subr.mxu0 0.0
    %171 = vmatpush2.msra.mxu0 0.0
    %172 = vmatprep.subr.mxu0 0.0
    %173 = vmatpush2.msra.mxu0 0.0
    %174 = vmatprep.subr.mxu0 0.0
    %175 = vmatpush2.msra.mxu0 0.0
    %176 = vmatprep.subr.mxu0 0.0
    %177 = vmatpush2.msra.mxu0 0.0
    %178 = vmatprep.subr.mxu0 0.0
    %179 = vmatpush2.msra.mxu0 0.0
    %180 = vmatprep.subr.mxu0 0.0
    %181 = vmatpush2.msra.mxu0 0.0
    %182 = vmatprep.subr.mxu0 0.0
    %183 = vmatpush2.msra.mxu0 0.0
    %184 = vmatprep.subr.mxu0 0.0
    %185 = vmatpush2.msra.mxu0 0.0
    %186 = vmatprep.subr.mxu0 0.0
    %187 = vmatpush2.msra.mxu0 0.0
    %188 = vmatprep.subr.mxu0 0.0
    %189 = vmatpush2.msra.mxu0 0.0
    %190 = vmatprep.subr.mxu0 0.0
    %191 = vmatpush2.msra.mxu0 0.0
    %192 = vmatprep.subr.mxu0 0.0
    %193 = vmatpush2.msra.mxu0 0.0
    %194 = vmatprep.subr.mxu0 0.0
    %195 = vmatpush2.msra.mxu0 0.0
    %196 = vmatprep.subr.mxu0 0.0
    %197 = vmatpush2.msra.mxu0 0.0
    %198 = vmatprep.subr.mxu0 0.0
    %199 = vmatpush2.msra.mxu0 0.0
    %200 = vmatprep.subr.mxu0 0.0
    %201 = vmatpush2.msra.mxu0 0.0
    %202 = vmatprep.mubr.f32.mxu0 0.0
    %203 = vmatmul.mubr.f32.gmra.mxu0 %v115
    %v204 = vpop.f32.mrf.mxu0
    %v205 = vadd.f32 %v76, %v204
    %v206 = vpop.f32.mrf.mxu0
    %207 = vmatprep.mubr.f32.mxu0 0.0
    %208 = vmatmul.mubr.f32.gmra.mxu0 %v118
    %v209 = vpop.f32.mrf.mxu0
    %v210 = vadd.f32 %v81, %v209
    %v211 = vpop.f32.mrf.mxu0
    %212 = vmatprep.mubr.f32.mxu0 0.0
    %213 = vmatmul.mubr.f32.gmra.mxu0 %v121
    %v214 = vpop.f32.mrf.mxu0
    %v215 = vadd.f32 %v86, %v214
    %v216 = vpop.f32.mrf.mxu0
    %217 = vmatprep.mubr.f32.mxu0 0.0
    %218 = vmatmul.mubr.f32.gmra.mxu0 %v124
    %v219 = vpop.f32.mrf.mxu0
    %v220 = vadd.f32 %v91, %v219
    %v221 = vpop.f32.mrf.mxu0
    %222 = vmatprep.mubr.f32.mxu0 0.0
    %223 = vmatmul.mubr.f32.gmra.mxu0 %v127
    %v224 = vpop.f32.mrf.mxu0
    %v225 = vadd.f32 %v96, %v224
    %v226 = vpop.f32.mrf.mxu0
    %227 = vmatprep.mubr.f32.mxu0 0.0
    %228 = vmatmul.mubr.f32.gmra.mxu0 %v130
    %v229 = vpop.f32.mrf.mxu0
    %v230 = vadd.f32 %v101, %v229
    %v231 = vpop.f32.mrf.mxu0
    %232 = vmatprep.mubr.f32.mxu0 0.0
    %233 = vmatmul.mubr.f32.gmra.mxu0 %v133
    %v234 = vpop.f32.mrf.mxu0
    %v235 = vadd.f32 %v106, %v234
    %v236 = vpop.f32.mrf.mxu0
    %237 = vmatprep.mubr.f32.mxu0 0.0
    %238 = vmatmul.mubr.f32.gmra.mxu0 %v136
    %v239 = vpop.f32.mrf.mxu0
    %v240 = vadd.f32 %v111, %v239
    %v241 = vpop.f32.mrf.mxu0
    %242 = vdwg.mxu0
    %243 = vst [vmem:[#allocation2] sm:$0xff] %v205
    %244 = vst [vmem:[#allocation2 + $0x8] sm:$0xff] %v210
    %245 = vst [vmem:[#allocation2 + $0x10] sm:$0xff] %v215
    %246 = vst [vmem:[#allocation2 + $0x18] sm:$0xff] %v220
    %247 = vst [vmem:[#allocation2 + $0x20] sm:$0xff] %v225
    %248 = vst [vmem:[#allocation2 + $0x28] sm:$0xff] %v230
    %249 = vst [vmem:[#allocation2 + $0x30] sm:$0xff] %v235
    %250 = vst [vmem:[#allocation2 + $0x38] sm:$0xff] %v240
    // Predicated region
    $region22: #{tpu_custom_call.1} parent=1 // pred_check
      %p251 = pneg %p29
    $region23: #{tpu_custom_call.1} parent=1 // pred_check_branch
      %253 = sbr.rel (%p251) target = $region25
    $region24: #{tpu_custom_call.1} parent=1 // pred_region
      %v254 = vld [vmem:[#allocation2] sm:$0xff]
      %v255 = vld [vmem:[#allocation2 + $0x8] sm:$0xff]
      %v256 = vld [vmem:[#allocation2 + $0x10] sm:$0xff]
      %v257 = vld [vmem:[#allocation2 + $0x18] sm:$0xff]
      %v258 = vld [vmem:[#allocation2 + $0x20] sm:$0xff]
      %v259 = vld [vmem:[#allocation2 + $0x28] sm:$0xff]
      %v260 = vld [vmem:[#allocation2 + $0x30] sm:$0xff]
      %v261 = vld [vmem:[#allocation2 + $0x38] sm:$0xff]
      %262 = vst [vmem:[#allocation6] sm:$0xff] %v254
      %263 = vst [vmem:[#allocation6 + $0x8] sm:$0xff] %v255
      %264 = vst [vmem:[#allocation6 + $0x10] sm:$0xff] %v256
      %265 = vst [vmem:[#allocation6 + $0x18] sm:$0xff] %v257
      %266 = vst [vmem:[#allocation6 + $0x20] sm:$0xff] %v258
      %267 = vst [vmem:[#allocation6 + $0x28] sm:$0xff] %v259
      %268 = vst [vmem:[#allocation6 + $0x30] sm:$0xff] %v260
      %269 = vst [vmem:[#allocation6 + $0x38] sm:$0xff] %v261
    $region25: #{tpu_custom_call.1} parent=1 // pred_fallthru
      _
    // Predicated region
    $region26: #{tpu_custom_call.1} parent=1 // pred_check
      _
    $region27: #{tpu_custom_call.1} parent=1 // pred_check_branch
      %271 = sbr.rel (0) target = $region29
    $region28: #{tpu_custom_call.1} parent=1 // pred_region
      %s273 = ssub.s32 1024, 1024
      %274 = vsyncadd [#allocation5], %s273
      %s275 = sshll.u32 [#allocation6], 4
      %s276 = int_to_ptr.vmem [resolvable:$true] %s275
      %281 = dma.vmem_to_hbm [thread:$0]  %s276, 1024, %s3, [#allocation5], 128, 128, 8
    $region29: #{tpu_custom_call.1} parent=1 // pred_fallthru
      _
    // Predicated region
    $region30: #{tpu_custom_call.1} parent=1 // pred_check
      _
    $region31: #{tpu_custom_call.1} parent=1 // pred_check_branch
      %283 = sbr.rel (0) target = $region33
    $region32: #{tpu_custom_call.1} parent=1 // pred_region
      %284 = dma.done [#allocation5], 1024
    $region33: #{tpu_custom_call.1} parent=1 // pred_fallthru
      _
    %285 = vsyncpa [#allocation4], 1
    %286 = vsyncpa [#allocation5], 1

</llo_original>
